<compile_context>
chip_gen: v7x
topology: tpu7x:2x2x1
jax: 0.10.0
libtpu: 0.0.40
codegen_flags: <defaults>
</compile_context>

<pallas_src>
import math
import functools

import jax
import jax.numpy as jnp
from jax.experimental import pallas as pl
from jax.experimental.pallas import tpu as pltpu


def _round_up(x, m):
    return ((x + m - 1) // m) * m


def _vmem_capacity_bytes():
    """Physical VMEM per core; conservative fallback if the query is unavailable."""
    try:
        return int(pltpu.get_tpu_info().vmem_capacity_bytes)
    except Exception:
        return 64 << 20   # v7x per-TC size; safe lower bound for v5e/v6e too


def _random_layer_kernel(n_inputs, scale, *refs):
    """refs = (x_0..x_{n-1}, w_0..w_{n-1}, out_ref); operands arrive in compute dtype."""
    x_refs = refs[:n_inputs]
    w_refs = refs[n_inputs:2 * n_inputs]
    out_ref = refs[2 * n_inputs]

    def proj(i):
        # MXU matmul with f32 accumulation; operands already in compute dtype.
        return jnp.dot(x_refs[i][...], w_refs[i][...],
                       preferred_element_type=jnp.float32)

    acc = proj(0) * scale                       # scale folded into first term
    for i in range(1, n_inputs):
        acc = acc * proj(i)                     # VPU elementwise product
    out_ref[...] = acc.astype(out_ref.dtype)


def prepare_random_matrices(random_matrices, *, compute_dtype=jnp.bfloat16):
    """One-time weight preprocessing: cast to compute dtype and pad the output
    dimension D up to a multiple of 128.  Doing this at construction keeps the
    per-call path from re-reading/re-writing the (fixed) random matrices."""
    D = random_matrices[0].shape[1]
    D_pad = _round_up(D, 128)
    ws = []
    for w in random_matrices:
        assert w.shape[1] == D, "all random matrices must share output_dim"
        if D_pad != D:
            w = jnp.pad(w, ((0, 0), (0, D_pad - D)))
        ws.append(w.astype(compute_dtype))
    return ws, D


def random_layer(input_list, random_matrices, *, output_dim=None,
                 block_b=None, block_d=None,
                 compute_dtype=jnp.bfloat16, out_dtype=jnp.float32):
    """Fused Pallas implementation of RandomLayer.forward.

    input_list:       list of [B, d_i] float arrays
    random_matrices:  list of [d_i, Dw] arrays.  Pass the output of
                      prepare_random_matrices() (bf16, 128-padded) to avoid a
                      per-call cast/pad; raw f32 weights also work.
    output_dim:       logical D (defaults to the weight width).  Needed when
                      weights are pre-padded so the scale / output slice use
                      the logical dimension.
    compute_dtype:    matmul operand dtype (bf16 default; f32 accumulation).
    out_dtype:        output dtype (f32 default; bf16 halves the output stream).
    returns:          [B, output_dim] array of out_dtype.
    """
    n = len(input_list)
    assert n == len(random_matrices) and n >= 1
    B = input_list[0].shape[0]
    dims = [w.shape[0] for w in random_matrices]
    W_last = random_matrices[0].shape[1]
    D = int(output_dim) if output_dim is not None else W_last
    D_pad = _round_up(W_last, 128)              # lane-dense (128-mult) weight width
    scale = 1.0 / math.pow(float(D), 1.0 / n)   # uses the *logical* output_dim

    x_itemsize = jnp.dtype(compute_dtype).itemsize
    w_itemsize = x_itemsize
    out_itemsize = jnp.dtype(out_dtype).itemsize

    # ---- generation-aware tile sizes -------------------------------------
    vmem_cap = _vmem_capacity_bytes()
    big_vmem = vmem_cap >= (96 << 20)           # v5e/v6e (128 MiB) vs v7x (64 MiB)
    b_align = 16 if x_itemsize < 4 else 8       # bf16 packs 2 rows / sublane

    if block_b is None:
        block_b = min(_round_up(B, b_align), 512 if big_vmem else 256)
    block_b = max(_round_up(block_b, b_align), b_align)

    if block_d is None:
        block_d = 1024 if big_vmem else 512
    block_d = max(_round_up(block_d, 128), 128)
    block_d = min(block_d, D_pad)
    while D_pad % block_d != 0:                 # keep an exact 128-mult divisor
        block_d -= 128

    def _footprint(bb, bd):
        x_blk = sum(bb * d_i * x_itemsize for d_i in dims)
        w_blk = sum(d_i * bd * w_itemsize for d_i in dims)
        o_blk = bb * bd * out_itemsize
        # double-buffered pipeline buffers + f32 intermediates (acc + one proj)
        return 2 * (x_blk + w_blk + o_blk) + 2 * bb * bd * 4

    vmem_ceiling = int(0.75 * vmem_cap)         # ~96 MiB v5e/v6e, ~48 MiB v7x
    budget = vmem_ceiling - (8 << 20)
    while _footprint(block_b, block_d) > budget and (block_d > 128 or block_b > b_align):
        if block_d > 128:
            block_d = max(128, _round_up(block_d // 2, 128))
            while D_pad % block_d != 0:
                block_d -= 128
        else:
            block_b = max(b_align, _round_up(block_b // 2, b_align))

    B_pad = _round_up(B, block_b)               # no dropped remainder rows
    nd = D_pad // block_d
    nb = B_pad // block_b

    # Expose >=2 blocks along a parallel axis so both v7x TensorCores get work.
    if nd * nb == 1:
        if B_pad >= 2 * b_align and B_pad % (2 * b_align) == 0:
            block_b = B_pad // 2
            nb = 2
        elif D_pad % 256 == 0:
            block_d = D_pad // 2
            nd = 2

    # ---- operand preparation (no-ops when weights were prepared) ---------
    xs = []
    for x in input_list:
        x = x.astype(compute_dtype)             # stream activations in compute dtype
        if B_pad != B:
            x = jnp.pad(x, ((0, B_pad - B), (0, 0)))
        xs.append(x)
    ws = []
    for w in random_matrices:
        if w.shape[1] != D_pad:
            w = jnp.pad(w, ((0, 0), (0, D_pad - w.shape[1])))
        if w.dtype != jnp.dtype(compute_dtype):
            w = w.astype(compute_dtype)
        ws.append(w)

    # ---- grid orientation: re-stream the SMALLER operand -----------------
    sum_d = sum(dims)
    x_bytes_total = B_pad * sum_d * x_itemsize
    w_bytes_total = sum_d * D_pad * w_itemsize
    stream_x = x_bytes_total <= w_bytes_total

    in_specs = []
    if stream_x:
        # grid = (D tiles, B tiles): weight column slab resident across batch,
        # activations re-streamed once per D tile.
        grid = (nd, nb)
        for d_i in dims:
            in_specs.append(pl.BlockSpec((block_b, d_i), lambda j, b: (b, 0)))
        for d_i in dims:
            in_specs.append(pl.BlockSpec((d_i, block_d), lambda j, b: (0, j)))
        out_spec = pl.BlockSpec((block_b, block_d), lambda j, b: (b, j))
        bytes_accessed = (nd * x_bytes_total + w_bytes_total
                          + B_pad * D_pad * out_itemsize)
    else:
        # grid = (B tiles, D tiles): activation rows resident across D,
        # weights re-streamed once per batch tile.
        grid = (nb, nd)
        for d_i in dims:
            in_specs.append(pl.BlockSpec((block_b, d_i), lambda b, j: (b, 0)))
        for d_i in dims:
            in_specs.append(pl.BlockSpec((d_i, block_d), lambda b, j: (0, j)))
        out_spec = pl.BlockSpec((block_b, block_d), lambda b, j: (b, j))
        bytes_accessed = (x_bytes_total + nb * w_bytes_total
                          + B_pad * D_pad * out_itemsize)

    footprint = _footprint(block_b, block_d)
    vmem_limit = int(min(max(footprint + (8 << 20), 32 << 20), vmem_ceiling))

    cost = pl.CostEstimate(
        flops=2 * B_pad * sum_d * D_pad + n * B_pad * D_pad,
        transcendentals=0,
        bytes_accessed=int(bytes_accessed),
    )

    kernel = functools.partial(_random_layer_kernel, n, scale)

    out = pl.pallas_call(
        kernel,
        grid=grid,
        in_specs=in_specs,
        out_specs=out_spec,
        out_shape=jax.ShapeDtypeStruct((B_pad, D_pad), out_dtype),
        compiler_params=pltpu.CompilerParams(
            dimension_semantics=("parallel", "parallel"),
            vmem_limit_bytes=vmem_limit),
        cost_estimate=cost,
    )(*xs, *ws)

    if B_pad != B or D_pad != D:
        out = out[:B, :D]
    return out


class RandomLayer:
    """JAX counterpart of the PyTorch module; weight cast/pad is hoisted to
    construction time so the per-call path only runs the fused kernel."""

    def __init__(self, input_dim_list, output_dim=1024, *, key=None,
                 compute_dtype=jnp.bfloat16, out_dtype=jnp.float32):
        key = jax.random.PRNGKey(0) if key is None else key
        keys = jax.random.split(key, max(len(input_dim_list), 1))
        self.random_matrix = [
            jax.random.normal(keys[i], (d, output_dim), dtype=jnp.float32)
            for i, d in enumerate(input_dim_list)]
        self.output_dim = output_dim
        self.compute_dtype = compute_dtype
        self.out_dtype = out_dtype
        self._ws, _ = prepare_random_matrices(self.random_matrix,
                                              compute_dtype=compute_dtype)

    def __call__(self, input_list, **kw):
        return random_layer(input_list, self._ws, output_dim=self.output_dim,
                            compute_dtype=self.compute_dtype,
                            out_dtype=self.out_dtype, **kw)


def random_layer_ref(input_list, random_matrices):
    """Pure-JAX f32 reference mirroring the PyTorch forward."""
    n = len(input_list)
    outs = [x @ w for x, w in zip(input_list, random_matrices)]
    result = outs[0] / math.pow(float(random_matrices[0].shape[1]), 1.0 / n)
    for o in outs[1:]:
        result = result * o
    return result


def _make_case(key, B, input_dims, D):
    keys = jax.random.split(key, 2 * len(input_dims))
    ws = [jax.random.normal(keys[i], (d, D), dtype=jnp.float32)
          for i, d in enumerate(input_dims)]
    xs = [jax.random.normal(keys[len(input_dims) + i], (B, d),
                            dtype=jnp.float32)
          for i, d in enumerate(input_dims)]
    return xs, ws


if __name__ == "__main__":
    key = jax.random.PRNGKey(0)
    k1, k2, k3, k4 = jax.random.split(key, 4)

    # Case 1: DANN-style shapes, aligned D. Exact f32 path + bf16 (prepared weights).
    B, input_dims, D = 8, [32, 64], 128
    xs, ws = _make_case(k1, B, input_dims, D)
    ref = random_layer_ref(xs, ws)

    out_f32 = jax.block_until_ready(
        random_layer(xs, ws, compute_dtype=jnp.float32))
    assert out_f32.shape == (B, D)
    assert jnp.allclose(out_f32, ref, atol=1e-3, rtol=1e-3), "f32 path mismatch"

    ws_prep, D_logical = prepare_random_matrices(ws, compute_dtype=jnp.bfloat16)
    out_bf16 = jax.block_until_ready(
        random_layer(xs, ws_prep, output_dim=D_logical,
                     compute_dtype=jnp.bfloat16))
    assert out_bf16.shape == (B, D)
    assert jnp.allclose(out_bf16, ref, atol=1e-1, rtol=5e-2), "bf16 path mismatch"

    # Case 2: unaligned B and D to exercise the padding/remainder path.
    B2, input_dims2, D2 = 10, [32, 64], 96
    xs2, ws2 = _make_case(k2, B2, input_dims2, D2)
    ref2 = random_layer_ref(xs2, ws2)
    out2 = jax.block_until_ready(
        random_layer(xs2, ws2, compute_dtype=jnp.float32))
    assert out2.shape == (B2, D2)
    assert jnp.allclose(out2, ref2, atol=1e-3, rtol=1e-3), "padded path mismatch"

    # Case 3: multi-tile grid, x re-streamed (weights resident over batch tiles).
    B3, input_dims3, D3 = 48, [32], 256
    xs3, ws3 = _make_case(k3, B3, input_dims3, D3)
    ref3 = random_layer_ref(xs3, ws3)
    out3 = jax.block_until_ready(
        random_layer(xs3, ws3, compute_dtype=jnp.float32,
                     block_b=16, block_d=128))
    assert out3.shape == (B3, D3)
    assert jnp.allclose(out3, ref3, atol=1e-3, rtol=1e-3), "stream_x grid mismatch"

    # Case 4: flipped grid (weights re-streamed, activations resident).
    B4, input_dims4, D4 = 256, [16], 128
    xs4, ws4 = _make_case(k4, B4, input_dims4, D4)
    ref4 = random_layer_ref(xs4, ws4)
    out4 = jax.block_until_ready(
        random_layer(xs4, ws4, compute_dtype=jnp.float32, block_b=64))
    assert out4.shape == (B4, D4)
    assert jnp.allclose(out4, ref4, atol=1e-3, rtol=1e-3), "stream_w grid mismatch"

    # Case 5: module-style class (construction-time weight prep), f32 compute.
    layer = RandomLayer([32, 64], output_dim=128, key=jax.random.PRNGKey(0),
                        compute_dtype=jnp.float32, out_dtype=jnp.float32)
    xs5 = [jax.random.normal(k, (8, d), dtype=jnp.float32)
           for k, d in zip(jax.random.split(jax.random.PRNGKey(1), 2), [32, 64])]
    ref5 = random_layer_ref(xs5, layer.random_matrix)
    out5 = jax.block_until_ready(layer(xs5))
    assert out5.shape == (8, 128)
    assert jnp.allclose(out5, ref5, atol=1e-3, rtol=1e-3), "class path mismatch"

    print("KERNEL_OK")
</pallas_src>

<mosaic_0001>
module attributes {stable_mosaic.version = 11 : i64} {
  func.func @_random_layer_kernel(%arg0: i32, %arg1: i32, %arg2: memref<8x32xf32, #tpu.memory_space<vmem>>, %arg3: memref<8x64xf32, #tpu.memory_space<vmem>>, %arg4: memref<32x128xf32, #tpu.memory_space<vmem>>, %arg5: memref<64x128xf32, #tpu.memory_space<vmem>>, %arg6: memref<8x128xf32, #tpu.memory_space<vmem>>) attributes {dimension_semantics = [#tpu.dimension_semantics<parallel>, #tpu.dimension_semantics<parallel>], iteration_bounds = array<i64: 1, 1>, scalar_prefetch = 0 : i64, scratch_operands = 0 : i64, tpu.core_type = #tpu.core_type<tc>, window_params = [{transform_indices = @transform_0, window_bounds = array<i64: 8, 32>}, {transform_indices = @transform_1, window_bounds = array<i64: 8, 64>}, {transform_indices = @transform_2, window_bounds = array<i64: 32, 128>}, {transform_indices = @transform_3, window_bounds = array<i64: 64, 128>}, {transform_indices = @transform_4, window_bounds = array<i64: 8, 128>}]} {
    %c0 = arith.constant 0 : index
    %c0_0 = arith.constant 0 : index
    %0 = vector.load %arg2[%c0, %c0_0] : memref<8x32xf32, #tpu.memory_space<vmem>>, vector<8x32xf32>
    %c0_1 = arith.constant 0 : index
    %c0_2 = arith.constant 0 : index
    %1 = vector.load %arg4[%c0_1, %c0_2] : memref<32x128xf32, #tpu.memory_space<vmem>>, vector<32x128xf32>
    %cst = arith.constant dense<0.000000e+00> : vector<8x128xf32>
    %2 = tpu.matmul %0, %1, %cst {dimension_numbers = #tpu.dot_dimension_numbers<[1], [0], [0], [1], [0, 0, 1, 1], [], []>} : vector<8x32xf32>, vector<32x128xf32>, vector<8x128xf32> -> vector<8x128xf32>
    %cst_3 = arith.constant 0.0883883461 : f32
    %3 = vector.broadcast %cst_3 : f32 to vector<8x128xf32>
    %4 = arith.mulf %2, %3 : vector<8x128xf32>
    %c0_4 = arith.constant 0 : index
    %c0_5 = arith.constant 0 : index
    %5 = vector.load %arg3[%c0_4, %c0_5] : memref<8x64xf32, #tpu.memory_space<vmem>>, vector<8x64xf32>
    %c0_6 = arith.constant 0 : index
    %c0_7 = arith.constant 0 : index
    %6 = vector.load %arg5[%c0_6, %c0_7] : memref<64x128xf32, #tpu.memory_space<vmem>>, vector<64x128xf32>
    %cst_8 = arith.constant dense<0.000000e+00> : vector<8x128xf32>
    %7 = tpu.matmul %5, %6, %cst_8 {dimension_numbers = #tpu.dot_dimension_numbers<[1], [0], [0], [1], [0, 0, 1, 1], [], []>} : vector<8x64xf32>, vector<64x128xf32>, vector<8x128xf32> -> vector<8x128xf32>
    %8 = arith.mulf %4, %7 : vector<8x128xf32>
    %c0_9 = arith.constant 0 : index
    %c0_10 = arith.constant 0 : index
    %9 = vector.load %arg6[%c0_9, %c0_10] : memref<8x128xf32, #tpu.memory_space<vmem>>, vector<8x128xf32>
    tpu.vector_store %arg6[%c0_9, %c0_10], %8 {strides = array<i32>} : memref<8x128xf32, #tpu.memory_space<vmem>>, vector<8x128xf32>,
    return
  }
  func.func @transform_0(%arg0: i32, %arg1: i32) -> (i32, i32) {
    %c0_i32 = arith.constant 0 : i32
    %c0_i32_0 = arith.constant 0 : i32
    return %arg1, %c0_i32 : i32, i32
  }
  func.func @transform_1(%arg0: i32, %arg1: i32) -> (i32, i32) {
    %c0_i32 = arith.constant 0 : i32
    %c0_i32_0 = arith.constant 0 : i32
    return %arg1, %c0_i32 : i32, i32
  }
  func.func @transform_2(%arg0: i32, %arg1: i32) -> (i32, i32) {
    %c0_i32 = arith.constant 0 : i32
    %c0_i32_0 = arith.constant 0 : i32
    return %c0_i32, %arg0 : i32, i32
  }
  func.func @transform_3(%arg0: i32, %arg1: i32) -> (i32, i32) {
    %c0_i32 = arith.constant 0 : i32
    %c0_i32_0 = arith.constant 0 : i32
    return %c0_i32, %arg0 : i32, i32
  }
  func.func @transform_4(%arg0: i32, %arg1: i32) -> (i32, i32) {
    %c0_i32 = arith.constant 0 : i32
    return %arg1, %arg0 : i32, i32
  }
}

</mosaic_0001>

<llo_original>
// kernel: tpu_custom_call.1
$region0: #{tpu_custom_call.1}
  #allocation0 [shape = 'u32[]', space=smem, size = 0x4, offset = 0x4, fixed_abs, tag = 'smem constant byte address 0x4 - core index']
  #allocation1 [shape = 'u32[144,128]{1,0:T(1,128)}', space=vmem, size = 0x12000, scoped, tag = 'internal scratch']
  %s0 = inlined_call_operand.hbm [shape: f32[8,32], index: 0, kind: input, shape index: {}]
  %s1 = inlined_call_operand.hbm [shape: f32[8,64], index: 1, kind: input, shape index: {}]
  %s2 = inlined_call_operand.hbm [shape: f32[32,128], index: 2, kind: input, shape index: {}]
  %s3 = inlined_call_operand.hbm [shape: f32[64,128], index: 3, kind: input, shape index: {}]
  %s4 = inlined_call_operand.hbm [shape: f32[8,128], index: 4, kind: output, shape index: {}]
  %s5 = sld [smem:[#allocation0]]
  $region42: #{tpu_custom_call.1} parent=0
    _
  %s7 = ssub.s32 1, %s5
  %s8 = scalar_select 0, %s7, %s5
  $region1: #{tpu_custom_call.1} parent=0
    #allocation2 [shape = 'u8[4096]{0}', space=vmem, size = 0x1000, scoped, tag = 'input window, operand 0, single buffered']
    #allocation3 [shape = 's32[1]{0}', space=sflag, size = 0x4, scoped, tag = 'scoped memory for tpu_custom_call.1']
    #allocation4 [shape = 's32[1]{0}', space=sflag, size = 0x4, scoped, tag = 'scoped memory for tpu_custom_call.1']
    #allocation5 [shape = 'u8[4096]{0}', space=vmem, size = 0x1000, scoped, tag = 'input window, operand 1, single buffered']
    #allocation6 [shape = 's32[1]{0}', space=sflag, size = 0x4, scoped, tag = 'scoped memory for tpu_custom_call.1']
    #allocation7 [shape = 'u8[16384]{0}', space=vmem, size = 0x4000, scoped, tag = 'input window, operand 2, single buffered']
    #allocation8 [shape = 'u8[32768]{0}', space=vmem, size = 0x8000, scoped, tag = 'input window, operand 3, single buffered']
    #allocation9 [shape = 's32[1]{0}', space=sflag, size = 0x4, scoped, tag = 'scoped memory for tpu_custom_call.1']
    #allocation10 [shape = 'u8[4096]{0}', space=vmem, size = 0x1000, scoped, tag = 'output window, operand 0, single buffered']
    %9 = vsyncpa [#allocation3], 0
    %10 = vsyncpa [#allocation6], 0
    %11 = vsyncpa [#allocation9], 0
    %12 = vsyncpa [#allocation4], 0
    // Predicated region
    $region2: #{tpu_custom_call.1} parent=1 // pred_check
      _
    $region3: #{tpu_custom_call.1} parent=1 // pred_check_branch
      %14 = sbr.rel (0) target = $region5
    $region4: #{tpu_custom_call.1} parent=1 // pred_region
      %s16 = ssub.s32 128, 128
      %17 = vsyncadd [#allocation3], %s16
      %s19 = sshll.u32 [#allocation2], 4
      %s20 = int_to_ptr.vmem [resolvable:$true] %s19
      %22 = dma.hbm_to_vmem [thread:$0]  %s0, 128, %s20, [#allocation3]
    $region5: #{tpu_custom_call.1} parent=1 // pred_fallthru
      _
    // Predicated region
    $region6: #{tpu_custom_call.1} parent=1 // pred_check
      _
    $region7: #{tpu_custom_call.1} parent=1 // pred_check_branch
      %24 = sbr.rel (0) target = $region9
    $region8: #{tpu_custom_call.1} parent=1 // pred_region
      %s26 = ssub.s32 128, 128
      %27 = vsyncadd [#allocation6], %s26
      %s29 = sshll.u32 [#allocation5], 4
      %s30 = int_to_ptr.vmem [resolvable:$true] %s29
      %32 = dma.hbm_to_vmem [thread:$0]  %s1, 128, %s30, [#allocation6]
    $region9: #{tpu_custom_call.1} parent=1 // pred_fallthru
      _
    // Predicated region
    $region10: #{tpu_custom_call.1} parent=1 // pred_check
      _
    $region11: #{tpu_custom_call.1} parent=1 // pred_check_branch
      %34 = sbr.rel (0) target = $region13
    $region12: #{tpu_custom_call.1} parent=1 // pred_region
      %s36 = ssub.s32 512, 512
      %37 = vsyncadd [#allocation6], %s36
      %s38 = sshll.u32 [#allocation7], 4
      %s39 = int_to_ptr.vmem [resolvable:$true] %s38
      %44 = dma.hbm_to_vmem [thread:$0]  %s2, 512, %s39, [#allocation6], 128, 128, 8
    $region13: #{tpu_custom_call.1} parent=1 // pred_fallthru
      _
    // Predicated region
    $region14: #{tpu_custom_call.1} parent=1 // pred_check
      _
    $region15: #{tpu_custom_call.1} parent=1 // pred_check_branch
      %46 = sbr.rel (0) target = $region17
    $region16: #{tpu_custom_call.1} parent=1 // pred_region
      %s48 = ssub.s32 1024, 1024
      %49 = vsyncadd [#allocation9], %s48
      %s50 = sshll.u32 [#allocation8], 4
      %s51 = int_to_ptr.vmem [resolvable:$true] %s50
      %56 = dma.hbm_to_vmem [thread:$0]  %s3, 1024, %s51, [#allocation9], 128, 128, 8
    $region17: #{tpu_custom_call.1} parent=1 // pred_fallthru
      _
    // Predicated region
    $region18: #{tpu_custom_call.1} parent=1 // pred_check
      _
    $region19: #{tpu_custom_call.1} parent=1 // pred_check_branch
      %58 = sbr.rel (0) target = $region21
    $region20: #{tpu_custom_call.1} parent=1 // pred_region
      %59 = dma.done [#allocation3], 128
    $region21: #{tpu_custom_call.1} parent=1 // pred_fallthru
      _
    // Predicated region
    $region22: #{tpu_custom_call.1} parent=1 // pred_check
      _
    $region23: #{tpu_custom_call.1} parent=1 // pred_check_branch
      %61 = sbr.rel (0) target = $region25
    $region24: #{tpu_custom_call.1} parent=1 // pred_region
      %62 = dma.done [#allocation6], 128
    $region25: #{tpu_custom_call.1} parent=1 // pred_fallthru
      _
    // Predicated region
    $region26: #{tpu_custom_call.1} parent=1 // pred_check
      _
    $region27: #{tpu_custom_call.1} parent=1 // pred_check_branch
      %64 = sbr.rel (0) target = $region29
    $region28: #{tpu_custom_call.1} parent=1 // pred_region
      %65 = dma.done [#allocation6], 512
    $region29: #{tpu_custom_call.1} parent=1 // pred_fallthru
      _
    // Predicated region
    $region30: #{tpu_custom_call.1} parent=1 // pred_check
      _
    $region31: #{tpu_custom_call.1} parent=1 // pred_check_branch
      %67 = sbr.rel (0) target = $region33
    $region32: #{tpu_custom_call.1} parent=1 // pred_region
      %68 = dma.done [#allocation9], 1024
    $region33: #{tpu_custom_call.1} parent=1 // pred_fallthru
      _
    %v69 = vld [vmem:[#allocation2] sm:$0xff]
    %v70 = vld [vmem:[#allocation7] sm:$0xff]
    %v71 = vld [vmem:[#allocation7 + $0x8] sm:$0xff]
    %v72 = vld [vmem:[#allocation7 + $0x10] sm:$0xff]
    %v73 = vld [vmem:[#allocation7 + $0x18] sm:$0xff]
    %vm74 = vcmask 261120
    %v76 = vsel %vm74, %v69, 0
    %78 = vmatprep.subr.mxu0 0.0
    %79 = vmatpush1.msra.mxu0 %v70
    %80 = vmatprep.subr.mxu0 0.0
    %81 = vmatpush1.msra.mxu0 %v71
    %82 = vmatprep.subr.mxu0 0.0
    %83 = vmatpush1.msra.mxu0 %v72
    %84 = vmatprep.subr.mxu0 0.0
    %85 = vmatpush1.msra.mxu0 %v73
    %86 = vmatprep.subr.mxu0 0.0
    %87 = vmatpush1.msra.mxu0 0.0
    %88 = vmatprep.subr.mxu0 0.0
    %89 = vmatpush1.msra.mxu0 0.0
    %90 = vmatprep.subr.mxu0 0.0
    %91 = vmatpush1.msra.mxu0 0.0
    %92 = vmatprep.subr.mxu0 0.0
    %93 = vmatpush1.msra.mxu0 0.0
    %94 = vmatprep.subr.mxu0 0.0
    %95 = vmatpush1.msra.mxu0 0.0
    %96 = vmatprep.subr.mxu0 0.0
    %97 = vmatpush1.msra.mxu0 0.0
    %98 = vmatprep.subr.mxu0 0.0
    %99 = vmatpush1.msra.mxu0 0.0
    %100 = vmatprep.subr.mxu0 0.0
    %101 = vmatpush1.msra.mxu0 0.0
    %102 = vmatprep.subr.mxu0 0.0
    %103 = vmatpush1.msra.mxu0 0.0
    %104 = vmatprep.subr.mxu0 0.0
    %105 = vmatpush1.msra.mxu0 0.0
    %106 = vmatprep.subr.mxu0 0.0
    %107 = vmatpush1.msra.mxu0 0.0
    %108 = vmatprep.subr.mxu0 0.0
    %109 = vmatpush1.msra.mxu0 0.0
    %110 = vmatprep.subr.mxu0 0.0
    %111 = vmatpush1.msra.mxu0 0.0
    %112 = vmatprep.subr.mxu0 0.0
    %113 = vmatpush1.msra.mxu0 0.0
    %114 = vmatprep.subr.mxu0 0.0
    %115 = vmatpush1.msra.mxu0 0.0
    %116 = vmatprep.subr.mxu0 0.0
    %117 = vmatpush1.msra.mxu0 0.0
    %118 = vmatprep.subr.mxu0 0.0
    %119 = vmatpush1.msra.mxu0 0.0
    %120 = vmatprep.subr.mxu0 0.0
    %121 = vmatpush1.msra.mxu0 0.0
    %122 = vmatprep.subr.mxu0 0.0
    %123 = vmatpush1.msra.mxu0 0.0
    %124 = vmatprep.subr.mxu0 0.0
    %125 = vmatpush1.msra.mxu0 0.0
    %126 = vmatprep.subr.mxu0 0.0
    %127 = vmatpush1.msra.mxu0 0.0
    %128 = vmatprep.subr.mxu0 0.0
    %129 = vmatpush1.msra.mxu0 0.0
    %130 = vmatprep.subr.mxu0 0.0
    %131 = vmatpush1.msra.mxu0 0.0
    %132 = vmatprep.subr.mxu0 0.0
    %133 = vmatpush1.msra.mxu0 0.0
    %134 = vmatprep.subr.mxu0 0.0
    %135 = vmatpush1.msra.mxu0 0.0
    %136 = vmatprep.subr.mxu0 0.0
    %137 = vmatpush1.msra.mxu0 0.0
    %138 = vmatprep.subr.mxu0 0.0
    %139 = vmatpush1.msra.mxu0 0.0
    %140 = vmatprep.subr.mxu0 0.0
    %141 = vmatpush1.msra.mxu0 0.0
    %142 = vmatprep.mubr.f32.mxu0 0.0
    %143 = vmatmul.mubr.f32.gmra.mrb[0].mxu0 %v76
    %v144 = vpop.f32.mrb[0].mxu0
    %v145 = vadd.f32 0.0, %v144
    %v146 = vpop.f32.mrb[0].mxu0
    %147 = vdwg.mxu0
    %v148 = vmul.f32 %v145, 0.088388346
    %v149 = vld [vmem:[#allocation5] sm:$0xff]
    %v150 = vld [vmem:[#allocation8] sm:$0xff]
    %v151 = vld [vmem:[#allocation8 + $0x8] sm:$0xff]
    %v152 = vld [vmem:[#allocation8 + $0x10] sm:$0xff]
    %v153 = vld [vmem:[#allocation8 + $0x18] sm:$0xff]
    %v154 = vld [vmem:[#allocation8 + $0x20] sm:$0xff]
    %v155 = vld [vmem:[#allocation8 + $0x28] sm:$0xff]
    %v156 = vld [vmem:[#allocation8 + $0x30] sm:$0xff]
    %v157 = vld [vmem:[#allocation8 + $0x38] sm:$0xff]
    %vm158 = vcmask 523264
    %v160 = vsel %vm158, %v149, 0
    %162 = vmatprep.subr.mxu0 0.0
    %163 = vmatpush1.msra.mxu0 %v150
    %164 = vmatprep.subr.mxu0 0.0
    %165 = vmatpush1.msra.mxu0 %v151
    %166 = vmatprep.subr.mxu0 0.0
    %167 = vmatpush1.msra.mxu0 %v152
    %168 = vmatprep.subr.mxu0 0.0
    %169 = vmatpush1.msra.mxu0 %v153
    %170 = vmatprep.subr.mxu0 0.0
    %171 = vmatpush1.msra.mxu0 %v154
    %172 = vmatprep.subr.mxu0 0.0
    %173 = vmatpush1.msra.mxu0 %v155
    %174 = vmatprep.subr.mxu0 0.0
    %175 = vmatpush1.msra.mxu0 %v156
    %176 = vmatprep.subr.mxu0 0.0
    %177 = vmatpush1.msra.mxu0 %v157
    %178 = vmatprep.subr.mxu0 0.0
    %179 = vmatpush1.msra.mxu0 0.0
    %180 = vmatprep.subr.mxu0 0.0
    %181 = vmatpush1.msra.mxu0 0.0
    %182 = vmatprep.subr.mxu0 0.0
    %183 = vmatpush1.msra.mxu0 0.0
    %184 = vmatprep.subr.mxu0 0.0
    %185 = vmatpush1.msra.mxu0 0.0
    %186 = vmatprep.subr.mxu0 0.0
    %187 = vmatpush1.msra.mxu0 0.0
    %188 = vmatprep.subr.mxu0 0.0
    %189 = vmatpush1.msra.mxu0 0.0
    %190 = vmatprep.subr.mxu0 0.0
    %191 = vmatpush1.msra.mxu0 0.0
    %192 = vmatprep.subr.mxu0 0.0
    %193 = vmatpush1.msra.mxu0 0.0
    %194 = vmatprep.subr.mxu0 0.0
    %195 = vmatpush1.msra.mxu0 0.0
    %196 = vmatprep.subr.mxu0 0.0
    %197 = vmatpush1.msra.mxu0 0.0
    %198 = vmatprep.subr.mxu0 0.0
    %199 = vmatpush1.msra.mxu0 0.0
    %200 = vmatprep.subr.mxu0 0.0
    %201 = vmatpush1.msra.mxu0 0.0
    %202 = vmatprep.subr.mxu0 0.0
    %203 = vmatpush1.msra.mxu0 0.0
    %204 = vmatprep.subr.mxu0 0.0
    %205 = vmatpush1.msra.mxu0 0.0
    %206 = vmatprep.subr.mxu0 0.0
    %207 = vmatpush1.msra.mxu0 0.0
    %208 = vmatprep.subr.mxu0 0.0
    %209 = vmatpush1.msra.mxu0 0.0
    %210 = vmatprep.subr.mxu0 0.0
    %211 = vmatpush1.msra.mxu0 0.0
    %212 = vmatprep.subr.mxu0 0.0
    %213 = vmatpush1.msra.mxu0 0.0
    %214 = vmatprep.subr.mxu0 0.0
    %215 = vmatpush1.msra.mxu0 0.0
    %216 = vmatprep.subr.mxu0 0.0
    %217 = vmatpush1.msra.mxu0 0.0
    %218 = vmatprep.subr.mxu0 0.0
    %219 = vmatpush1.msra.mxu0 0.0
    %220 = vmatprep.subr.mxu0 0.0
    %221 = vmatpush1.msra.mxu0 0.0
    %222 = vmatprep.subr.mxu0 0.0
    %223 = vmatpush1.msra.mxu0 0.0
    %224 = vmatprep.subr.mxu0 0.0
    %225 = vmatpush1.msra.mxu0 0.0
    %226 = vmatprep.mubr.f32.mxu0 0.0
    %227 = vmatmul.mubr.f32.gmra.mrb[0].mxu0 %v160
    %v228 = vpop.f32.mrb[0].mxu0
    %v229 = vadd.f32 0.0, %v228
    %v230 = vpop.f32.mrb[0].mxu0
    %231 = vdwg.mxu0
    %v232 = vmul.f32 %v148, %v229
    %233 = vst [vmem:[#allocation10] sm:$0xff] %v232
    // Predicated region
    $region34: #{tpu_custom_call.1} parent=1 // pred_check
      _
    $region35: #{tpu_custom_call.1} parent=1 // pred_check_branch
      %235 = sbr.rel (0) target = $region37
    $region36: #{tpu_custom_call.1} parent=1 // pred_region
      %s237 = ssub.s32 128, 128
      %238 = vsyncadd [#allocation4], %s237
      %s240 = sshll.u32 [#allocation10], 4
      %s241 = int_to_ptr.vmem [resolvable:$true] %s240
      %243 = dma.vmem_to_hbm [thread:$0]  %s241, 128, %s4, [#allocation4]
    $region37: #{tpu_custom_call.1} parent=1 // pred_fallthru
      _
    // Predicated region
    $region38: #{tpu_custom_call.1} parent=1 // pred_check
      _
    $region39: #{tpu_custom_call.1} parent=1 // pred_check_branch
      %245 = sbr.rel (0) target = $region41
    $region40: #{tpu_custom_call.1} parent=1 // pred_region
      %246 = dma.done [#allocation4], 128
    $region41: #{tpu_custom_call.1} parent=1 // pred_fallthru
      _
    %247 = vsyncpa [#allocation3], 1
    %248 = vsyncpa [#allocation6], 1
    %249 = vsyncpa [#allocation9], 1
    %250 = vsyncpa [#allocation4], 1

</llo_original>
